<compile_context>
chip_gen: v7x
topology: tpu7x:2x2x1
jax: 0.10.0
libtpu: 0.0.40
codegen_flags: <defaults>
</compile_context>

<pallas_src>
import jax
import jax.numpy as jnp
from jax.experimental import pallas as pl
from jax.experimental.pallas import tpu as pltpu


def _round_up(x, m):
    return ((x + m - 1) // m) * m


def _vmem_capacity_bytes():
    """Per-TensorCore VMEM capacity (128 MiB on v5e/v6e, 64 MiB on v7x)."""
    try:
        cap = int(pltpu.get_tpu_info().vmem_capacity_bytes)
        if cap > 0:
            return cap
    except Exception:
        pass
    return 64 * 1024 * 1024          # conservative default (v7x-sized)


# ----------------------------- kernels ---------------------------------------

def ffn_kernel(x_ref, w1_ref, b1_ref, w2_ref, b2_ref, o_ref):
    """Fused FFN with fully VMEM-resident weights. grid = (row tiles,)."""
    x = x_ref[...].astype(w1_ref.dtype)                    # in-VMEM cast (VPU)
    h = jnp.dot(x, w1_ref[...], preferred_element_type=jnp.float32)
    h = jnp.maximum(h + b1_ref[...], 0.0)                  # (TM,H) + (1,H)
    y = jnp.dot(h.astype(w2_ref.dtype), w2_ref[...],
                preferred_element_type=jnp.float32)
    o_ref[...] = (y + b2_ref[...]).astype(o_ref.dtype)


def ffn_kernel_tiled_out(x_ref, w1_ref, b1_ref, w2_ref, b2_ref, o_ref, h_ref):
    """Fallback when both weights don't fit VMEM-resident:
    grid = (row tiles, out-dim tiles). W2/b2/y are pipelined over the out
    axis; hidden activations are computed once per row tile (j == 0) and kept
    in VMEM scratch across the "arbitrary" out axis."""
    @pl.when(pl.program_id(1) == 0)
    def _():
        x = x_ref[...].astype(w1_ref.dtype)
        h = jnp.dot(x, w1_ref[...], preferred_element_type=jnp.float32)
        h_ref[...] = jnp.maximum(h + b1_ref[...], 0.0).astype(h_ref.dtype)

    y = jnp.dot(h_ref[...], w2_ref[...], preferred_element_type=jnp.float32)
    o_ref[...] = (y + b2_ref[...]).astype(o_ref.dtype)


# --------------------------- parameter prep ----------------------------------

def prepare_ffn_params(w1, b1, w2, b2, *, compute_dtype=jnp.bfloat16):
    """Pad feature dims to lane-dense multiples of 128 and cast weights to the
    MXU compute dtype ONCE. Call this outside the per-step path and reuse the
    result; it removes a full HBM read+write of both weight matrices per call.
    Skips the copy entirely when a tensor is already aligned + correctly typed.

    w1: (in, hid), w2: (hid, out) (transposed vs nn.Linear.weight),
    b1: (hid,), b2: (out,)."""
    in_dim, hid_dim = w1.shape
    out_dim = w2.shape[1]
    in_p, hid_p, out_p = (_round_up(d, 128) for d in (in_dim, hid_dim, out_dim))

    def pad_w(w, r, c):
        if w.shape == (r, c) and w.dtype == compute_dtype:
            return w                                   # already aligned: no copy
        return jnp.zeros((r, c), compute_dtype).at[:w.shape[0], :w.shape[1]].set(
            w.astype(compute_dtype))

    def pad_b(b, c):
        if b.shape[0] == c and b.dtype == jnp.float32:
            return b.reshape(1, c)                     # reshape only (metadata)
        return jnp.zeros((1, c), jnp.float32).at[0, :b.shape[0]].set(
            b.astype(jnp.float32))

    return dict(
        w1=pad_w(w1, in_p, hid_p), b1=pad_b(b1, hid_p),
        w2=pad_w(w2, hid_p, out_p), b2=pad_b(b2, out_p),
        dims=(in_dim, hid_dim, out_dim), compute_dtype=compute_dtype,
    )


# ----------------------------- pallas calls -----------------------------------

def _call_single_axis(xp, w1p, b1p, w2p, b2p, *, tm, in_p, hid_p, out_p,
                      out_dtype, vmem_limit, cost):
    m_p = xp.shape[0]

    def run(resident_kw):
        return pl.pallas_call(
            ffn_kernel,
            out_shape=jax.ShapeDtypeStruct((m_p, out_p), out_dtype),
            grid_spec=pltpu.PrefetchScalarGridSpec(
                num_scalar_prefetch=0,
                grid=(m_p // tm,),
                in_specs=[
                    pl.BlockSpec((tm, in_p), lambda i: (i, 0)),      # x (pipelined)
                    pl.BlockSpec((in_p, hid_p), lambda i: (0, 0), **resident_kw),
                    pl.BlockSpec((1, hid_p), lambda i: (0, 0), **resident_kw),
                    pl.BlockSpec((hid_p, out_p), lambda i: (0, 0), **resident_kw),
                    pl.BlockSpec((1, out_p), lambda i: (0, 0), **resident_kw),
                ],
                out_specs=pl.BlockSpec((tm, out_p), lambda i: (i, 0)),
            ),
            compiler_params=pltpu.CompilerParams(
                dimension_semantics=("parallel",),      # rows shard across TCs
                vmem_limit_bytes=vmem_limit,
            ),
            cost_estimate=cost,
        )(xp, w1p, b1p, w2p, b2p)

    try:
        # Resident operands' block index never changes -> single-buffer them.
        return run(dict(pipeline_mode=pl.Buffered(1)))
    except Exception:
        # Fallback if per-BlockSpec pipeline_mode is unsupported in this build.
        return run({})


def _call_tiled_out(xp, w1p, b1p, w2p, b2p, *, tm, tn, in_p, hid_p, out_p,
                    out_dtype, compute_dtype, vmem_limit, cost):
    m_p = xp.shape[0]

    def run(resident_kw):
        return pl.pallas_call(
            ffn_kernel_tiled_out,
            out_shape=jax.ShapeDtypeStruct((m_p, out_p), out_dtype),
            grid_spec=pltpu.PrefetchScalarGridSpec(
                num_scalar_prefetch=0,
                grid=(m_p // tm, out_p // tn),
                in_specs=[
                    pl.BlockSpec((tm, in_p), lambda i, j: (i, 0)),
                    pl.BlockSpec((in_p, hid_p), lambda i, j: (0, 0), **resident_kw),
                    pl.BlockSpec((1, hid_p), lambda i, j: (0, 0), **resident_kw),
                    pl.BlockSpec((hid_p, tn), lambda i, j: (0, j)),  # W2 pipelined
                    pl.BlockSpec((1, tn), lambda i, j: (0, j)),
                ],
                out_specs=pl.BlockSpec((tm, tn), lambda i, j: (i, j)),
                scratch_shapes=[pltpu.VMEM((tm, hid_p), compute_dtype)],
            ),
            compiler_params=pltpu.CompilerParams(
                dimension_semantics=("parallel", "arbitrary"),
                vmem_limit_bytes=vmem_limit,
            ),
            cost_estimate=cost,
        )(xp, w1p, b1p, w2p, b2p)

    try:
        return run(dict(pipeline_mode=pl.Buffered(1)))
    except Exception:
        return run({})


# ------------------------------- wrapper --------------------------------------

def two_layer_ffn(x, params, *, tm_max=512):
    """x: (..., input_dim) -> (..., output_dim). params from prepare_ffn_params."""
    compute_dtype = params["compute_dtype"]
    cd_bytes = jnp.dtype(compute_dtype).itemsize
    in_dim, hid_dim, out_dim = params["dims"]
    w1p, b1p, w2p, b2p = params["w1"], params["b1"], params["w2"], params["b2"]
    in_p, hid_p = w1p.shape
    out_p = w2p.shape[1]

    orig_shape = x.shape
    assert orig_shape[-1] == in_dim
    out_dtype = x.dtype
    out_bytes = jnp.dtype(out_dtype).itemsize
    m = 1
    for d in orig_shape[:-1]:
        m *= d
    x2d = x.reshape(m, in_dim)

    # Generation-aware VMEM budget (v5e/v6e: 128 MiB, v7x: 64 MiB per TC).
    vmem_cap = _vmem_capacity_bytes()
    vmem_limit = int(vmem_cap * 0.75)      # leave headroom for compiler scratch
    budget = int(vmem_cap * 0.60)

    # Bytes/elem of the activation tile actually fed to the kernel (f32 when we
    # can skip the wrapper-side pad/cast). Use the max -> valid either way.
    x_bytes = max(jnp.dtype(x.dtype).itemsize, cd_bytes)

    # Resident weights + biases, single-buffered (pl.Buffered(1)).
    w_resident = ((in_p * hid_p + hid_p * out_p) * cd_bytes
                  + (hid_p + out_p) * 4)

    cost = pl.CostEstimate(
        flops=2 * m * (in_p * hid_p + hid_p * out_p),
        transcendentals=0,
        bytes_accessed=(m * in_dim * x_bytes + m * out_dim * out_bytes
                        + (in_p * hid_p + hid_p * out_p) * cd_bytes
                        + (hid_p + out_p) * 4),
    )

    def per_tile_bytes(tm_c, tn_c):
        # Accurate per-row-tile footprint: pipelined x/y + in-kernel temps.
        return (2 * tm_c * in_p * x_bytes        # x tile (double-buffered)
                + 2 * tm_c * tn_c * out_bytes    # out tile (double-buffered)
                + tm_c * hid_p * 4               # h, f32 accumulator
                + tm_c * hid_p * cd_bytes        # h cast to compute dtype
                + tm_c * tn_c * 4)               # y, f32 accumulator

    tm_cands = list(dict.fromkeys(
        c for c in (tm_max, 512, 256, 128, 64, 32, 16) if c <= tm_max))

    tm_budget = None
    for cand in tm_cands:
        if w_resident + per_tile_bytes(cand, out_p) <= budget:
            tm_budget = cand
            break

    if tm_budget is not None:
        # --- main path: both weights VMEM-resident, 1-D grid over rows -------
        tm = min(tm_budget, _round_up(m, 16))    # keep bf16-friendly 16-multiple
        m_p = _round_up(m, tm)
        # Give both v7x TensorCores work when there are enough rows: keep >=2
        # row tiles without shrinking the tile below 256.
        if m_p // tm < 2 and m > 512:
            half = max(256, _round_up((m + 1) // 2, 256))
            if half < tm:
                tm = half
                m_p = _round_up(m, tm)
        xp = _maybe_pad_x(x2d, m, in_dim, m_p, in_p, compute_dtype)
        out = _call_single_axis(xp, w1p, b1p, w2p, b2p, tm=tm, in_p=in_p,
                                hid_p=hid_p, out_p=out_p, out_dtype=out_dtype,
                                vmem_limit=vmem_limit, cost=cost)
    else:
        # --- fallback: tile W2/b2/y over the output dim (W1 stays resident) --
        w1_resident = in_p * hid_p * cd_bytes + hid_p * 4
        tn_cands = list(dict.fromkeys(
            t for t in (out_p, 2048, 1024, 512, 256, 128)
            if t <= out_p and out_p % t == 0))
        choice = None
        for tn in tn_cands:
            w2_tile = 2 * (hid_p * tn * cd_bytes + tn * 4)   # double-buffered
            for cand in tm_cands:
                per = (per_tile_bytes(cand, tn)
                       + cand * hid_p * cd_bytes)            # h VMEM scratch
                if w1_resident + w2_tile + per <= budget:
                    choice = (cand, tn)
                    break
            if choice is not None:
                break
        if choice is None:
            # TODO(synk): add a third grid axis (K-tiling over in/hid) so even
            # W1 need not be VMEM-resident; fail loudly instead of crawling.
            raise ValueError(
                "TwoLayerFFN weights too large to keep W1 VMEM-resident on this "
                f"TPU (~{w1_resident / 2**20:.1f} MiB needed, "
                f"budget {budget / 2**20:.1f} MiB).")
        tm, tn = choice
        tm = min(tm, _round_up(m, 16))
        m_p = _round_up(m, tm)
        xp = _maybe_pad_x(x2d, m, in_dim, m_p, in_p, compute_dtype)
        out = _call_tiled_out(xp, w1p, b1p, w2p, b2p, tm=tm, tn=tn, in_p=in_p,
                              hid_p=hid_p, out_p=out_p, out_dtype=out_dtype,
                              compute_dtype=compute_dtype,
                              vmem_limit=vmem_limit, cost=cost)

    if out.shape != (m, out_dim):
        out = out[:m, :out_dim]
    return out.reshape(orig_shape[:-1] + (out_dim,))


def _maybe_pad_x(x2d, m, in_dim, m_p, in_p, compute_dtype):
    """Skip the wrapper-side pad/cast when already aligned (kernel casts)."""
    if m_p == m and in_p == in_dim:
        return x2d
    return jnp.zeros((m_p, in_p), compute_dtype).at[:m, :in_dim].set(
        x2d.astype(compute_dtype))


def two_layer_ffn_from_weights(x, w1, b1, w2, b2, **kw):
    """One-shot convenience; prefer prepare_ffn_params + two_layer_ffn."""
    return two_layer_ffn(x, prepare_ffn_params(w1, b1, w2, b2), **kw)


def init_params(key, input_dim, hidden_dim, output_dim, dtype=jnp.float32):
    """Deterministic init mimicking nn.Linear's U(-1/sqrt(fan_in), +1/sqrt(fan_in))."""
    k1, k2, k3, k4 = jax.random.split(key, 4)
    bound1 = 1.0 / (input_dim ** 0.5)
    bound2 = 1.0 / (hidden_dim ** 0.5)
    w1 = jax.random.uniform(k1, (input_dim, hidden_dim), dtype, -bound1, bound1)
    b1 = jax.random.uniform(k2, (hidden_dim,), dtype, -bound1, bound1)
    w2 = jax.random.uniform(k3, (hidden_dim, output_dim), dtype, -bound2, bound2)
    b2 = jax.random.uniform(k4, (output_dim,), dtype, -bound2, bound2)
    return w1, b1, w2, b2


if __name__ == "__main__":
    input_dim, hidden_dim, output_dim = 32, 64, 32
    batch, seq = 2, 8

    key = jax.random.PRNGKey(0)
    kx, kp = jax.random.split(key)
    x = jax.random.normal(kx, (batch, seq, input_dim), jnp.float32)
    w1, b1, w2, b2 = init_params(kp, input_dim, hidden_dim, output_dim)

    params = prepare_ffn_params(w1, b1, w2, b2)   # pad/cast once, reuse per call
    y = two_layer_ffn(x, params)
    y = jax.block_until_ready(y)
    assert y.shape == (batch, seq, output_dim)

    # Reference with the same bf16-operand / f32-accumulate recipe.
    xb = x.reshape(-1, input_dim).astype(jnp.bfloat16)
    h_ref = jnp.dot(xb, w1.astype(jnp.bfloat16),
                    preferred_element_type=jnp.float32) + b1
    h_ref = jnp.maximum(h_ref, 0.0)
    ref = jnp.dot(h_ref.astype(jnp.bfloat16), w2.astype(jnp.bfloat16),
                  preferred_element_type=jnp.float32) + b2
    ref = ref.astype(x.dtype).reshape(batch, seq, output_dim)
    assert jnp.allclose(y, ref, atol=1e-2, rtol=1e-2), \
        float(jnp.max(jnp.abs(y - ref)))

    # Loose sanity check against the pure-f32 math of the PyTorch module.
    ref_f32 = jnp.maximum(x @ w1 + b1, 0.0) @ w2 + b2
    assert jnp.allclose(y, ref_f32, atol=5e-2, rtol=5e-2), \
        float(jnp.max(jnp.abs(y - ref_f32)))

    print("KERNEL_OK")
</pallas_src>

<mosaic_0001>
module attributes {stable_mosaic.version = 11 : i64} {
  func.func @ffn_kernel(%arg0: i32, %arg1: memref<16x128xbf16, #tpu.memory_space<vmem>>, %arg2: memref<128x128xbf16, #tpu.memory_space<vmem>>, %arg3: memref<1x128xf32, #tpu.memory_space<vmem>>, %arg4: memref<128x128xbf16, #tpu.memory_space<vmem>>, %arg5: memref<1x128xf32, #tpu.memory_space<vmem>>, %arg6: memref<16x128xf32, #tpu.memory_space<vmem>>) attributes {dimension_semantics = [#tpu.dimension_semantics<parallel>], iteration_bounds = array<i64: 1>, scalar_prefetch = 0 : i64, scratch_operands = 0 : i64, tpu.core_type = #tpu.core_type<tc>, window_params = [{transform_indices = @transform_0, window_bounds = array<i64: 16, 128>}, {pipeline_mode = #tpu.pipeline_mode<synchronous>, transform_indices = @transform_1, window_bounds = array<i64: 128, 128>}, {pipeline_mode = #tpu.pipeline_mode<synchronous>, transform_indices = @transform_2, window_bounds = array<i64: 1, 128>}, {pipeline_mode = #tpu.pipeline_mode<synchronous>, transform_indices = @transform_3, window_bounds = array<i64: 128, 128>}, {pipeline_mode = #tpu.pipeline_mode<synchronous>, transform_indices = @transform_4, window_bounds = array<i64: 1, 128>}, {transform_indices = @transform_5, window_bounds = array<i64: 16, 128>}]} {
    %c0 = arith.constant 0 : index
    %c0_0 = arith.constant 0 : index
    %0 = vector.load %arg1[%c0, %c0_0] : memref<16x128xbf16, #tpu.memory_space<vmem>>, vector<16x128xbf16>
    %c0_1 = arith.constant 0 : index
    %c0_2 = arith.constant 0 : index
    %1 = vector.load %arg2[%c0_1, %c0_2] : memref<128x128xbf16, #tpu.memory_space<vmem>>, vector<128x128xbf16>
    %cst = arith.constant dense<0.000000e+00> : vector<16x128xf32>
    %2 = tpu.matmul %0, %1, %cst {dimension_numbers = #tpu.dot_dimension_numbers<[1], [0], [0], [1], [0, 0, 1, 1], [], []>} : vector<16x128xbf16>, vector<128x128xbf16>, vector<16x128xf32> -> vector<16x128xf32>
    %c0_3 = arith.constant 0 : index
    %c0_4 = arith.constant 0 : index
    %3 = vector.load %arg3[%c0_3, %c0_4] : memref<1x128xf32, #tpu.memory_space<vmem>>, vector<1x128xf32>
    %4 = vector.broadcast %3 : vector<1x128xf32> to vector<16x128xf32>
    %5 = arith.addf %2, %4 : vector<16x128xf32>
    %cst_5 = arith.constant 0.000000e+00 : f32
    %6 = vector.broadcast %cst_5 : f32 to vector<16x128xf32>
    %7 = arith.maximumf %5, %6 : vector<16x128xf32>
    %8 = arith.truncf %7 : vector<16x128xf32> to vector<16x128xbf16>
    %c0_6 = arith.constant 0 : index
    %c0_7 = arith.constant 0 : index
    %9 = vector.load %arg4[%c0_6, %c0_7] : memref<128x128xbf16, #tpu.memory_space<vmem>>, vector<128x128xbf16>
    %cst_8 = arith.constant dense<0.000000e+00> : vector<16x128xf32>
    %10 = tpu.matmul %8, %9, %cst_8 {dimension_numbers = #tpu.dot_dimension_numbers<[1], [0], [0], [1], [0, 0, 1, 1], [], []>} : vector<16x128xbf16>, vector<128x128xbf16>, vector<16x128xf32> -> vector<16x128xf32>
    %c0_9 = arith.constant 0 : index
    %c0_10 = arith.constant 0 : index
    %11 = vector.load %arg5[%c0_9, %c0_10] : memref<1x128xf32, #tpu.memory_space<vmem>>, vector<1x128xf32>
    %12 = vector.broadcast %11 : vector<1x128xf32> to vector<16x128xf32>
    %13 = arith.addf %10, %12 : vector<16x128xf32>
    %c0_11 = arith.constant 0 : index
    %c0_12 = arith.constant 0 : index
    %14 = vector.load %arg6[%c0_11, %c0_12] : memref<16x128xf32, #tpu.memory_space<vmem>>, vector<16x128xf32>
    tpu.vector_store %arg6[%c0_11, %c0_12], %13 {strides = array<i32>} : memref<16x128xf32, #tpu.memory_space<vmem>>, vector<16x128xf32>,
    return
  }
  func.func @transform_0(%arg0: i32) -> (i32, i32) {
    %c0_i32 = arith.constant 0 : i32
    %c0_i32_0 = arith.constant 0 : i32
    return %arg0, %c0_i32 : i32, i32
  }
  func.func @transform_1(%arg0: i32) -> (i32, i32) {
    %c0_i32 = arith.constant 0 : i32
    %c0_i32_0 = arith.constant 0 : i32
    %c0_i32_1 = arith.constant 0 : i32
    return %c0_i32, %c0_i32_0 : i32, i32
  }
  func.func @transform_2(%arg0: i32) -> (i32, i32) {
    %c0_i32 = arith.constant 0 : i32
    %c0_i32_0 = arith.constant 0 : i32
    %c0_i32_1 = arith.constant 0 : i32
    return %c0_i32, %c0_i32_0 : i32, i32
  }
  func.func @transform_3(%arg0: i32) -> (i32, i32) {
    %c0_i32 = arith.constant 0 : i32
    %c0_i32_0 = arith.constant 0 : i32
    %c0_i32_1 = arith.constant 0 : i32
    return %c0_i32, %c0_i32_0 : i32, i32
  }
  func.func @transform_4(%arg0: i32) -> (i32, i32) {
    %c0_i32 = arith.constant 0 : i32
    %c0_i32_0 = arith.constant 0 : i32
    %c0_i32_1 = arith.constant 0 : i32
    return %c0_i32, %c0_i32_0 : i32, i32
  }
  func.func @transform_5(%arg0: i32) -> (i32, i32) {
    %c0_i32 = arith.constant 0 : i32
    %c0_i32_0 = arith.constant 0 : i32
    return %arg0, %c0_i32 : i32, i32
  }
}

module attributes {stable_mosaic.version = 11 : i64} {
  func.func @ffn_kernel(%arg0: i32, %arg1: memref<16x128xbf16, #tpu.memory_space<vmem>>, %arg2: memref<128x128xbf16, #tpu.memory_space<vmem>>, %arg3: memref<1x128xf32, #tpu.memory_space<vmem>>, %arg4: memref<128x128xbf16, #tpu.memory_space<vmem>>, %arg5: memref<1x128xf32, #tpu.memory_space<vmem>>, %arg6: memref<16x128xf32, #tpu.memory_space<vmem>>) attributes {dimension_semantics = [#tpu.dimension_semantics<parallel>], iteration_bounds = array<i64: 1>, scalar_prefetch = 0 : i64, scratch_operands = 0 : i64, tpu.core_type = #tpu.core_type<tc>, window_params = [{transform_indices = @transform_0, window_bounds = array<i64: 16, 128>}, {pipeline_mode = #tpu.pipeline_mode<synchronous>, transform_indices = @transform_1, window_bounds = array<i64: 128, 128>}, {pipeline_mode = #tpu.pipeline_mode<synchronous>, transform_indices = @transform_2, window_bounds = array<i64: 1, 128>}, {pipeline_mode = #tpu.pipeline_mode<synchronous>, transform_indices = @transform_3, window_bounds = array<i64: 128, 128>}, {pipeline_mode = #tpu.pipeline_mode<synchronous>, transform_indices = @transform_4, window_bounds = array<i64: 1, 128>}, {transform_indices = @transform_5, window_bounds = array<i64: 16, 128>}]} {
    %c0 = arith.constant 0 : index
    %c0_0 = arith.constant 0 : index
    %0 = vector.load %arg1[%c0, %c0_0] : memref<16x128xbf16, #tpu.memory_space<vmem>>, vector<16x128xbf16>
    %c0_1 = arith.constant 0 : index
    %c0_2 = arith.constant 0 : index
    %1 = vector.load %arg2[%c0_1, %c0_2] : memref<128x128xbf16, #tpu.memory_space<vmem>>, vector<128x128xbf16>
    %cst = arith.constant dense<0.000000e+00> : vector<16x128xf32>
    %2 = tpu.matmul %0, %1, %cst {dimension_numbers = #tpu.dot_dimension_numbers<[1], [0], [0], [1], [0, 0, 1, 1], [], []>} : vector<16x128xbf16>, vector<128x128xbf16>, vector<16x128xf32> -> vector<16x128xf32>
    %c0_3 = arith.constant 0 : index
    %c0_4 = arith.constant 0 : index
    %3 = vector.load %arg3[%c0_3, %c0_4] : memref<1x128xf32, #tpu.memory_space<vmem>>, vector<1x128xf32>
    %4 = vector.broadcast %3 : vector<1x128xf32> to vector<16x128xf32>
    %5 = arith.addf %2, %4 : vector<16x128xf32>
    %cst_5 = arith.constant 0.000000e+00 : f32
    %6 = vector.broadcast %cst_5 : f32 to vector<16x128xf32>
    %7 = arith.maximumf %5, %6 : vector<16x128xf32>
    %8 = arith.truncf %7 : vector<16x128xf32> to vector<16x128xbf16>
    %c0_6 = arith.constant 0 : index
    %c0_7 = arith.constant 0 : index
    %9 = vector.load %arg4[%c0_6, %c0_7] : memref<128x128xbf16, #tpu.memory_space<vmem>>, vector<128x128xbf16>
    %cst_8 = arith.constant dense<0.000000e+00> : vector<16x128xf32>
    %10 = tpu.matmul %8, %9, %cst_8 {dimension_numbers = #tpu.dot_dimension_numbers<[1], [0], [0], [1], [0, 0, 1, 1], [], []>} : vector<16x128xbf16>, vector<128x128xbf16>, vector<16x128xf32> -> vector<16x128xf32>
    %c0_9 = arith.constant 0 : index
    %c0_10 = arith.constant 0 : index
    %11 = vector.load %arg5[%c0_9, %c0_10] : memref<1x128xf32, #tpu.memory_space<vmem>>, vector<1x128xf32>
    %12 = vector.broadcast %11 : vector<1x128xf32> to vector<16x128xf32>
    %13 = arith.addf %10, %12 : vector<16x128xf32>
    %c0_11 = arith.constant 0 : index
    %c0_12 = arith.constant 0 : index
    %14 = vector.load %arg6[%c0_11, %c0_12] : memref<16x128xf32, #tpu.memory_space<vmem>>, vector<16x128xf32>
    tpu.vector_store %arg6[%c0_11, %c0_12], %13 {strides = array<i32>} : memref<16x128xf32, #tpu.memory_space<vmem>>, vector<16x128xf32>,
    return
  }
  func.func @transform_0(%arg0: i32) -> (i32, i32) {
    %c0_i32 = arith.constant 0 : i32
    %c0_i32_0 = arith.constant 0 : i32
    return %arg0, %c0_i32 : i32, i32
  }
  func.func @transform_1(%arg0: i32) -> (i32, i32) {
    %c0_i32 = arith.constant 0 : i32
    %c0_i32_0 = arith.constant 0 : i32
    %c0_i32_1 = arith.constant 0 : i32
    return %c0_i32, %c0_i32_0 : i32, i32
  }
  func.func @transform_2(%arg0: i32) -> (i32, i32) {
    %c0_i32 = arith.constant 0 : i32
    %c0_i32_0 = arith.constant 0 : i32
    %c0_i32_1 = arith.constant 0 : i32
    return %c0_i32, %c0_i32_0 : i32, i32
  }
  func.func @transform_3(%arg0: i32) -> (i32, i32) {
    %c0_i32 = arith.constant 0 : i32
    %c0_i32_0 = arith.constant 0 : i32
    %c0_i32_1 = arith.constant 0 : i32
    return %c0_i32, %c0_i32_0 : i32, i32
  }
  func.func @transform_4(%arg0: i32) -> (i32, i32) {
    %c0_i32 = arith.constant 0 : i32
    %c0_i32_0 = arith.constant 0 : i32
    %c0_i32_1 = arith.constant 0 : i32
    return %c0_i32, %c0_i32_0 : i32, i32
  }
  func.func @transform_5(%arg0: i32) -> (i32, i32) {
    %c0_i32 = arith.constant 0 : i32
    %c0_i32_0 = arith.constant 0 : i32
    return %arg0, %c0_i32 : i32, i32
  }
}

</mosaic_0001>

<llo_original>
// kernel: tpu_custom_call.1
$region0: #{tpu_custom_call.1}
  #allocation0 [shape = 'u32[]', space=smem, size = 0x4, offset = 0x4, fixed_abs, tag = 'smem constant byte address 0x4 - core index']
  #allocation1 [shape = 'u32[144,128]{1,0:T(1,128)}', space=vmem, size = 0x12000, scoped, tag = 'internal scratch']
  %s0 = inlined_call_operand.hbm [shape: bf16[16,128], index: 0, kind: input, shape index: {}]
  %s1 = inlined_call_operand.hbm [shape: bf16[128,128], index: 1, kind: input, shape index: {}]
  %s2 = inlined_call_operand.vmem [shape: f32[1,128], index: 2, kind: input, shape index: {}]
  %s3 = inlined_call_operand.hbm [shape: bf16[128,128], index: 3, kind: input, shape index: {}]
  %s4 = inlined_call_operand.vmem [shape: f32[1,128], index: 4, kind: input, shape index: {}]
  %s5 = inlined_call_operand.hbm [shape: f32[16,128], index: 5, kind: output, shape index: {}]
  %s6 = sld [smem:[#allocation0]]
  $region42: #{tpu_custom_call.1} parent=0
    _
  %s8 = ssub.s32 1, %s6
  %s9 = scalar_select 0, %s8, %s6
  $region1: #{tpu_custom_call.1} parent=0
    #allocation2 [shape = 'u8[4096]{0}', space=vmem, size = 0x1000, scoped, tag = 'input window, operand 0, single buffered']
    #allocation3 [shape = 's32[1]{0}', space=sflag, size = 0x4, scoped, tag = 'scoped memory for tpu_custom_call.1']
    #allocation4 [shape = 's32[1]{0}', space=sflag, size = 0x4, scoped, tag = 'scoped memory for tpu_custom_call.1']
    #allocation5 [shape = 'u8[32768]{0}', space=vmem, size = 0x8000, scoped, tag = 'input window, operand 1, single buffered']
    #allocation6 [shape = 's32[1]{0}', space=sflag, size = 0x4, scoped, tag = 'scoped memory for tpu_custom_call.1']
    #allocation7 [shape = 'u8[32768]{0}', space=vmem, size = 0x8000, scoped, tag = 'input window, operand 3, single buffered']
    #allocation8 [shape = 'u8[8192]{0}', space=vmem, size = 0x2000, scoped, tag = 'output window, operand 0, single buffered']
    %10 = vsyncpa [#allocation3], 0
    %11 = vsyncpa [#allocation6], 0
    %12 = vsyncpa [#allocation4], 0
    // Predicated region
    $region2: #{tpu_custom_call.1} parent=1 // pred_check
      _
    $region3: #{tpu_custom_call.1} parent=1 // pred_check_branch
      %14 = sbr.rel (0) target = $region5
    $region4: #{tpu_custom_call.1} parent=1 // pred_region
      %s16 = ssub.s32 128, 128
      %17 = vsyncadd [#allocation3], %s16
      %s18 = sshll.u32 [#allocation2], 4
      %s19 = int_to_ptr.vmem [resolvable:$true] %s18
      %24 = dma.hbm_to_vmem [thread:$0]  %s0, 128, %s19, [#allocation3], 64, 64, 4
    $region5: #{tpu_custom_call.1} parent=1 // pred_fallthru
      _
    // Predicated region
    $region6: #{tpu_custom_call.1} parent=1 // pred_check
      _
    $region7: #{tpu_custom_call.1} parent=1 // pred_check_branch
      %26 = sbr.rel (0) target = $region9
    $region8: #{tpu_custom_call.1} parent=1 // pred_region
      %s28 = ssub.s32 1024, 1024
      %29 = vsyncadd [#allocation6], %s28
      %s30 = sshll.u32 [#allocation5], 4
      %s31 = int_to_ptr.vmem [resolvable:$true] %s30
      %36 = dma.hbm_to_vmem [thread:$0]  %s1, 1024, %s31, [#allocation6], 64, 64, 4
    $region9: #{tpu_custom_call.1} parent=1 // pred_fallthru
      _
    // Predicated region
    $region10: #{tpu_custom_call.1} parent=1 // pred_check
      _
    $region11: #{tpu_custom_call.1} parent=1 // pred_check_branch
      %38 = sbr.rel (0) target = $region13
    $region12: #{tpu_custom_call.1} parent=1 // pred_region
      _
    $region13: #{tpu_custom_call.1} parent=1 // pred_fallthru
      _
    // Predicated region
    $region14: #{tpu_custom_call.1} parent=1 // pred_check
      _
    $region15: #{tpu_custom_call.1} parent=1 // pred_check_branch
      %40 = sbr.rel (0) target = $region17
    $region16: #{tpu_custom_call.1} parent=1 // pred_region
      %s42 = ssub.s32 1024, 1024
      %43 = vsyncadd [#allocation6], %s42
      %s44 = sshll.u32 [#allocation7], 4
      %s45 = int_to_ptr.vmem [resolvable:$true] %s44
      %50 = dma.hbm_to_vmem [thread:$0]  %s3, 1024, %s45, [#allocation6], 64, 64, 4
    $region17: #{tpu_custom_call.1} parent=1 // pred_fallthru
      _
    // Predicated region
    $region18: #{tpu_custom_call.1} parent=1 // pred_check
      _
    $region19: #{tpu_custom_call.1} parent=1 // pred_check_branch
      %52 = sbr.rel (0) target = $region21
    $region20: #{tpu_custom_call.1} parent=1 // pred_region
      _
    $region21: #{tpu_custom_call.1} parent=1 // pred_fallthru
      _
    // Predicated region
    $region22: #{tpu_custom_call.1} parent=1 // pred_check
      _
    $region23: #{tpu_custom_call.1} parent=1 // pred_check_branch
      %54 = sbr.rel (0) target = $region25
    $region24: #{tpu_custom_call.1} parent=1 // pred_region
      %55 = dma.done [#allocation3], 128
    $region25: #{tpu_custom_call.1} parent=1 // pred_fallthru
      _
    // Predicated region
    $region26: #{tpu_custom_call.1} parent=1 // pred_check
      _
    $region27: #{tpu_custom_call.1} parent=1 // pred_check_branch
      %57 = sbr.rel (0) target = $region29
    $region28: #{tpu_custom_call.1} parent=1 // pred_region
      %58 = dma.done [#allocation6], 1024
    $region29: #{tpu_custom_call.1} parent=1 // pred_fallthru
      _
    // Predicated region
    $region30: #{tpu_custom_call.1} parent=1 // pred_check
      _
    $region31: #{tpu_custom_call.1} parent=1 // pred_check_branch
      %60 = sbr.rel (0) target = $region33
    $region32: #{tpu_custom_call.1} parent=1 // pred_region
      %61 = dma.done [#allocation6], 1024
    $region33: #{tpu_custom_call.1} parent=1 // pred_fallthru
      _
    %v63 = vld [vmem:[#allocation2] sm:$0xf]
    %v64 = vld [vmem:[#allocation2 + $0x4] sm:$0xf]
    %v65 = vld [vmem:[#allocation5] sm:$0xf]
    %v66 = vld [vmem:[#allocation5 + $0x4] sm:$0xf]
    %v67 = vld [vmem:[#allocation5 + $0x8] sm:$0xf]
    %v68 = vld [vmem:[#allocation5 + $0xc] sm:$0xf]
    %v69 = vld [vmem:[#allocation5 + $0x10] sm:$0xf]
    %v70 = vld [vmem:[#allocation5 + $0x14] sm:$0xf]
    %v71 = vld [vmem:[#allocation5 + $0x18] sm:$0xf]
    %v72 = vld [vmem:[#allocation5 + $0x1c] sm:$0xf]
    %v73 = vld [vmem:[#allocation5 + $0x20] sm:$0xf]
    %v74 = vld [vmem:[#allocation5 + $0x24] sm:$0xf]
    %v75 = vld [vmem:[#allocation5 + $0x28] sm:$0xf]
    %v76 = vld [vmem:[#allocation5 + $0x2c] sm:$0xf]
    %v77 = vld [vmem:[#allocation5 + $0x30] sm:$0xf]
    %v78 = vld [vmem:[#allocation5 + $0x34] sm:$0xf]
    %v79 = vld [vmem:[#allocation5 + $0x38] sm:$0xf]
    %v80 = vld [vmem:[#allocation5 + $0x3c] sm:$0xf]
    %v81 = vld [vmem:[%s2] sm:$0x1]
    %v83 = vlaneseq
    %v84 = vshrl.u32 %v83, 7
    %v85 = vsub.s32 0, %v84
    %v86 = vrot.slane %v81, %v85
    %v90 = vunpack.c.l.b16 %v63
    %v91 = vunpack.c.l.b16 %v64
    %v92 = vpack.c.b16 %v91, %v90
    %v110 = vunpack.c.l.b16 %v65
    %v111 = vunpack.c.l.b16 %v66
    %v112 = vunpack.c.l.b16 %v67
    %v113 = vunpack.c.l.b16 %v68
    %v114 = vunpack.c.l.b16 %v69
    %v115 = vunpack.c.l.b16 %v70
    %v116 = vunpack.c.l.b16 %v71
    %v117 = vunpack.c.l.b16 %v72
    %v118 = vunpack.c.l.b16 %v73
    %v119 = vunpack.c.l.b16 %v74
    %v120 = vunpack.c.l.b16 %v75
    %v121 = vunpack.c.l.b16 %v76
    %v122 = vunpack.c.l.b16 %v77
    %v123 = vunpack.c.l.b16 %v78
    %v124 = vunpack.c.l.b16 %v79
    %v125 = vunpack.c.l.b16 %v80
    %v126 = vpack.c.b16 %v111, %v110
    %v127 = vpack.c.b16 %v113, %v112
    %v128 = vpack.c.b16 %v115, %v114
    %v129 = vpack.c.b16 %v117, %v116
    %v130 = vpack.c.b16 %v119, %v118
    %v131 = vpack.c.b16 %v121, %v120
    %v132 = vpack.c.b16 %v123, %v122
    %v133 = vpack.c.b16 %v125, %v124
    %142 = vmatprep.subr.bf16.mxu0 0
    %143 = vmatpush1.bf16.msra.mxu0 %v126
    %144 = vmatprep.subr.bf16.mxu0 0
    %145 = vmatpush1.bf16.msra.mxu0 %v127
    %146 = vmatprep.subr.bf16.mxu0 0
    %147 = vmatpush1.bf16.msra.mxu0 %v128
    %148 = vmatprep.subr.bf16.mxu0 0
    %149 = vmatpush1.bf16.msra.mxu0 %v129
    %150 = vmatprep.subr.bf16.mxu0 0
    %151 = vmatpush1.bf16.msra.mxu0 %v130
    %152 = vmatprep.subr.bf16.mxu0 0
    %153 = vmatpush1.bf16.msra.mxu0 %v131
    %154 = vmatprep.subr.bf16.mxu0 0
    %155 = vmatpush1.bf16.msra.mxu0 %v132
    %156 = vmatprep.subr.bf16.mxu0 0
    %157 = vmatpush1.bf16.msra.mxu0 %v133
    %158 = vmatprep.subr.bf16.mxu0 0
    %159 = vmatpush1.bf16.msra.mxu0 0
    %160 = vmatprep.subr.bf16.mxu0 0
    %161 = vmatpush1.bf16.msra.mxu0 0
    %162 = vmatprep.subr.bf16.mxu0 0
    %163 = vmatpush1.bf16.msra.mxu0 0
    %164 = vmatprep.subr.bf16.mxu0 0
    %165 = vmatpush1.bf16.msra.mxu0 0
    %166 = vmatprep.subr.bf16.mxu0 0
    %167 = vmatpush1.bf16.msra.mxu0 0
    %168 = vmatprep.subr.bf16.mxu0 0
    %169 = vmatpush1.bf16.msra.mxu0 0
    %170 = vmatprep.subr.bf16.mxu0 0
    %171 = vmatpush1.bf16.msra.mxu0 0
    %172 = vmatprep.subr.bf16.mxu0 0
    %173 = vmatpush1.bf16.msra.mxu0 0
    %174 = vmatprep.mubr.bf16.mxu0 0
    %175 = vmatmul.mubr.bf16.gmra.mrb[0].mxu0 %v92
    %v176 = vpop.f32.mrb[0].mxu0
    %v177 = vadd.f32 %v86, %v176
    %v178 = vpop.f32.mrb[0].mxu0
    %v179 = vpop.f32.mrb[0].mxu0
    %v180 = vadd.f32 %v86, %v179
    %v181 = vpop.f32.mrb[0].mxu0
    %182 = vdwg.mxu0
    %v183 = vmax.f32 %v177, 0.0
    %v184 = vmax.f32 %v180, 0.0
    %v185 = vpack.c.bf16 %v184, %v183
    %v186 = vld [vmem:[#allocation7] sm:$0xf]
    %v187 = vld [vmem:[#allocation7 + $0x4] sm:$0xf]
    %v188 = vld [vmem:[#allocation7 + $0x8] sm:$0xf]
    %v189 = vld [vmem:[#allocation7 + $0xc] sm:$0xf]
    %v190 = vld [vmem:[#allocation7 + $0x10] sm:$0xf]
    %v191 = vld [vmem:[#allocation7 + $0x14] sm:$0xf]
    %v192 = vld [vmem:[#allocation7 + $0x18] sm:$0xf]
    %v193 = vld [vmem:[#allocation7 + $0x1c] sm:$0xf]
    %v194 = vld [vmem:[#allocation7 + $0x20] sm:$0xf]
    %v195 = vld [vmem:[#allocation7 + $0x24] sm:$0xf]
    %v196 = vld [vmem:[#allocation7 + $0x28] sm:$0xf]
    %v197 = vld [vmem:[#allocation7 + $0x2c] sm:$0xf]
    %v198 = vld [vmem:[#allocation7 + $0x30] sm:$0xf]
    %v199 = vld [vmem:[#allocation7 + $0x34] sm:$0xf]
    %v200 = vld [vmem:[#allocation7 + $0x38] sm:$0xf]
    %v201 = vld [vmem:[#allocation7 + $0x3c] sm:$0xf]
    %v202 = vld [vmem:[%s4] sm:$0x1]
    %v204 = vlaneseq
    %v205 = vshrl.u32 %v204, 7
    %v206 = vsub.s32 0, %v205
    %v207 = vrot.slane %v202, %v206
    %v225 = vunpack.c.l.b16 %v186
    %v226 = vunpack.c.l.b16 %v187
    %v227 = vunpack.c.l.b16 %v188
    %v228 = vunpack.c.l.b16 %v189
    %v229 = vunpack.c.l.b16 %v190
    %v230 = vunpack.c.l.b16 %v191
    %v231 = vunpack.c.l.b16 %v192
    %v232 = vunpack.c.l.b16 %v193
    %v233 = vunpack.c.l.b16 %v194
    %v234 = vunpack.c.l.b16 %v195
    %v235 = vunpack.c.l.b16 %v196
    %v236 = vunpack.c.l.b16 %v197
    %v237 = vunpack.c.l.b16 %v198
    %v238 = vunpack.c.l.b16 %v199
    %v239 = vunpack.c.l.b16 %v200
    %v240 = vunpack.c.l.b16 %v201
    %v241 = vpack.c.b16 %v226, %v225
    %v242 = vpack.c.b16 %v228, %v227
    %v243 = vpack.c.b16 %v230, %v229
    %v244 = vpack.c.b16 %v232, %v231
    %v245 = vpack.c.b16 %v234, %v233
    %v246 = vpack.c.b16 %v236, %v235
    %v247 = vpack.c.b16 %v238, %v237
    %v248 = vpack.c.b16 %v240, %v239
    %257 = vmatprep.subr.bf16.mxu0 0
    %258 = vmatpush1.bf16.msra.mxu0 %v241
    %259 = vmatprep.subr.bf16.mxu0 0
    %260 = vmatpush1.bf16.msra.mxu0 %v242
    %261 = vmatprep.subr.bf16.mxu0 0
    %262 = vmatpush1.bf16.msra.mxu0 %v243
    %263 = vmatprep.subr.bf16.mxu0 0
    %264 = vmatpush1.bf16.msra.mxu0 %v244
    %265 = vmatprep.subr.bf16.mxu0 0
    %266 = vmatpush1.bf16.msra.mxu0 %v245
    %267 = vmatprep.subr.bf16.mxu0 0
    %268 = vmatpush1.bf16.msra.mxu0 %v246
    %269 = vmatprep.subr.bf16.mxu0 0
    %270 = vmatpush1.bf16.msra.mxu0 %v247
    %271 = vmatprep.subr.bf16.mxu0 0
    %272 = vmatpush1.bf16.msra.mxu0 %v248
    %273 = vmatprep.subr.bf16.mxu0 0
    %274 = vmatpush1.bf16.msra.mxu0 0
    %275 = vmatprep.subr.bf16.mxu0 0
    %276 = vmatpush1.bf16.msra.mxu0 0
    %277 = vmatprep.subr.bf16.mxu0 0
    %278 = vmatpush1.bf16.msra.mxu0 0
    %279 = vmatprep.subr.bf16.mxu0 0
    %280 = vmatpush1.bf16.msra.mxu0 0
    %281 = vmatprep.subr.bf16.mxu0 0
    %282 = vmatpush1.bf16.msra.mxu0 0
    %283 = vmatprep.subr.bf16.mxu0 0
    %284 = vmatpush1.bf16.msra.mxu0 0
    %285 = vmatprep.subr.bf16.mxu0 0
    %286 = vmatpush1.bf16.msra.mxu0 0
    %287 = vmatprep.subr.bf16.mxu0 0
    %288 = vmatpush1.bf16.msra.mxu0 0
    %289 = vmatprep.mubr.bf16.mxu0 0
    %290 = vmatmul.mubr.bf16.gmra.mrb[0].mxu0 %v185
    %v291 = vpop.f32.mrb[0].mxu0
    %v292 = vadd.f32 %v207, %v291
    %v293 = vpop.f32.mrb[0].mxu0
    %v294 = vpop.f32.mrb[0].mxu0
    %v295 = vadd.f32 %v207, %v294
    %v296 = vpop.f32.mrb[0].mxu0
    %297 = vdwg.mxu0
    %298 = vst [vmem:[#allocation8] sm:$0xff] %v292
    %299 = vst [vmem:[#allocation8 + $0x8] sm:$0xff] %v295
    // Predicated region
    $region34: #{tpu_custom_call.1} parent=1 // pred_check
      _
    $region35: #{tpu_custom_call.1} parent=1 // pred_check_branch
      %301 = sbr.rel (0) target = $region37
    $region36: #{tpu_custom_call.1} parent=1 // pred_region
      %s303 = ssub.s32 256, 256
      %304 = vsyncadd [#allocation4], %s303
      %s305 = sshll.u32 [#allocation8], 4
      %s306 = int_to_ptr.vmem [resolvable:$true] %s305
      %311 = dma.vmem_to_hbm [thread:$0]  %s306, 256, %s5, [#allocation4], 128, 128, 8
    $region37: #{tpu_custom_call.1} parent=1 // pred_fallthru
      _
    // Predicated region
    $region38: #{tpu_custom_call.1} parent=1 // pred_check
      _
    $region39: #{tpu_custom_call.1} parent=1 // pred_check_branch
      %313 = sbr.rel (0) target = $region41
    $region40: #{tpu_custom_call.1} parent=1 // pred_region
      %314 = dma.done [#allocation4], 256
    $region41: #{tpu_custom_call.1} parent=1 // pred_fallthru
      _
    %315 = vsyncpa [#allocation3], 1
    %316 = vsyncpa [#allocation6], 1
    %317 = vsyncpa [#allocation4], 1

// kernel: tpu_custom_call.1
$region0: #{tpu_custom_call.1}
  #allocation0 [shape = 'u32[]', space=smem, size = 0x4, offset = 0x4, fixed_abs, tag = 'smem constant byte address 0x4 - core index']
  #allocation1 [shape = 'u32[144,128]{1,0:T(1,128)}', space=vmem, size = 0x12000, scoped, tag = 'internal scratch']
  %s0 = inlined_call_operand.hbm [shape: bf16[16,128], index: 0, kind: input, shape index: {}]
  %s1 = inlined_call_operand.hbm [shape: bf16[128,128], index: 1, kind: input, shape index: {}]
  %s2 = inlined_call_operand.vmem [shape: f32[1,128], index: 2, kind: input, shape index: {}]
  %s3 = inlined_call_operand.hbm [shape: bf16[128,128], index: 3, kind: input, shape index: {}]
  %s4 = inlined_call_operand.vmem [shape: f32[1,128], index: 4, kind: input, shape index: {}]
  %s5 = inlined_call_operand.hbm [shape: f32[16,128], index: 5, kind: output, shape index: {}]
  %s6 = sld [smem:[#allocation0]]
  $region42: #{tpu_custom_call.1} parent=0
    _
  %s8 = ssub.s32 1, %s6
  %s9 = scalar_select 0, %s8, %s6
  $region1: #{tpu_custom_call.1} parent=0
    #allocation2 [shape = 'u8[4096]{0}', space=vmem, size = 0x1000, scoped, tag = 'input window, operand 0, single buffered']
    #allocation3 [shape = 's32[1]{0}', space=sflag, size = 0x4, scoped, tag = 'scoped memory for tpu_custom_call.1']
    #allocation4 [shape = 's32[1]{0}', space=sflag, size = 0x4, scoped, tag = 'scoped memory for tpu_custom_call.1']
    #allocation5 [shape = 'u8[32768]{0}', space=vmem, size = 0x8000, scoped, tag = 'input window, operand 1, single buffered']
    #allocation6 [shape = 's32[1]{0}', space=sflag, size = 0x4, scoped, tag = 'scoped memory for tpu_custom_call.1']
    #allocation7 [shape = 'u8[32768]{0}', space=vmem, size = 0x8000, scoped, tag = 'input window, operand 3, single buffered']
    #allocation8 [shape = 'u8[8192]{0}', space=vmem, size = 0x2000, scoped, tag = 'output window, operand 0, single buffered']
    %10 = vsyncpa [#allocation3], 0
    %11 = vsyncpa [#allocation6], 0
    %12 = vsyncpa [#allocation4], 0
    // Predicated region
    $region2: #{tpu_custom_call.1} parent=1 // pred_check
      _
    $region3: #{tpu_custom_call.1} parent=1 // pred_check_branch
      %14 = sbr.rel (0) target = $region5
    $region4: #{tpu_custom_call.1} parent=1 // pred_region
      %s16 = ssub.s32 128, 128
      %17 = vsyncadd [#allocation3], %s16
      %s18 = sshll.u32 [#allocation2], 4
      %s19 = int_to_ptr.vmem [resolvable:$true] %s18
      %24 = dma.hbm_to_vmem [thread:$0]  %s0, 128, %s19, [#allocation3], 64, 64, 4
    $region5: #{tpu_custom_call.1} parent=1 // pred_fallthru
      _
    // Predicated region
    $region6: #{tpu_custom_call.1} parent=1 // pred_check
      _
    $region7: #{tpu_custom_call.1} parent=1 // pred_check_branch
      %26 = sbr.rel (0) target = $region9
    $region8: #{tpu_custom_call.1} parent=1 // pred_region
      %s28 = ssub.s32 1024, 1024
      %29 = vsyncadd [#allocation6], %s28
      %s30 = sshll.u32 [#allocation5], 4
      %s31 = int_to_ptr.vmem [resolvable:$true] %s30
      %36 = dma.hbm_to_vmem [thread:$0]  %s1, 1024, %s31, [#allocation6], 64, 64, 4
    $region9: #{tpu_custom_call.1} parent=1 // pred_fallthru
      _
    // Predicated region
    $region10: #{tpu_custom_call.1} parent=1 // pred_check
      _
    $region11: #{tpu_custom_call.1} parent=1 // pred_check_branch
      %38 = sbr.rel (0) target = $region13
    $region12: #{tpu_custom_call.1} parent=1 // pred_region
      _
    $region13: #{tpu_custom_call.1} parent=1 // pred_fallthru
      _
    // Predicated region
    $region14: #{tpu_custom_call.1} parent=1 // pred_check
      _
    $region15: #{tpu_custom_call.1} parent=1 // pred_check_branch
      %40 = sbr.rel (0) target = $region17
    $region16: #{tpu_custom_call.1} parent=1 // pred_region
      %s42 = ssub.s32 1024, 1024
      %43 = vsyncadd [#allocation6], %s42
      %s44 = sshll.u32 [#allocation7], 4
      %s45 = int_to_ptr.vmem [resolvable:$true] %s44
      %50 = dma.hbm_to_vmem [thread:$0]  %s3, 1024, %s45, [#allocation6], 64, 64, 4
    $region17: #{tpu_custom_call.1} parent=1 // pred_fallthru
      _
    // Predicated region
    $region18: #{tpu_custom_call.1} parent=1 // pred_check
      _
    $region19: #{tpu_custom_call.1} parent=1 // pred_check_branch
      %52 = sbr.rel (0) target = $region21
    $region20: #{tpu_custom_call.1} parent=1 // pred_region
      _
    $region21: #{tpu_custom_call.1} parent=1 // pred_fallthru
      _
    // Predicated region
    $region22: #{tpu_custom_call.1} parent=1 // pred_check
      _
    $region23: #{tpu_custom_call.1} parent=1 // pred_check_branch
      %54 = sbr.rel (0) target = $region25
    $region24: #{tpu_custom_call.1} parent=1 // pred_region
      %55 = dma.done [#allocation3], 128
    $region25: #{tpu_custom_call.1} parent=1 // pred_fallthru
      _
    // Predicated region
    $region26: #{tpu_custom_call.1} parent=1 // pred_check
      _
    $region27: #{tpu_custom_call.1} parent=1 // pred_check_branch
      %57 = sbr.rel (0) target = $region29
    $region28: #{tpu_custom_call.1} parent=1 // pred_region
      %58 = dma.done [#allocation6], 1024
    $region29: #{tpu_custom_call.1} parent=1 // pred_fallthru
      _
    // Predicated region
    $region30: #{tpu_custom_call.1} parent=1 // pred_check
      _
    $region31: #{tpu_custom_call.1} parent=1 // pred_check_branch
      %60 = sbr.rel (0) target = $region33
    $region32: #{tpu_custom_call.1} parent=1 // pred_region
      %61 = dma.done [#allocation6], 1024
    $region33: #{tpu_custom_call.1} parent=1 // pred_fallthru
      _
    %v63 = vld [vmem:[#allocation2] sm:$0xf]
    %v64 = vld [vmem:[#allocation2 + $0x4] sm:$0xf]
    %v65 = vld [vmem:[#allocation5] sm:$0xf]
    %v66 = vld [vmem:[#allocation5 + $0x4] sm:$0xf]
    %v67 = vld [vmem:[#allocation5 + $0x8] sm:$0xf]
    %v68 = vld [vmem:[#allocation5 + $0xc] sm:$0xf]
    %v69 = vld [vmem:[#allocation5 + $0x10] sm:$0xf]
    %v70 = vld [vmem:[#allocation5 + $0x14] sm:$0xf]
    %v71 = vld [vmem:[#allocation5 + $0x18] sm:$0xf]
    %v72 = vld [vmem:[#allocation5 + $0x1c] sm:$0xf]
    %v73 = vld [vmem:[#allocation5 + $0x20] sm:$0xf]
    %v74 = vld [vmem:[#allocation5 + $0x24] sm:$0xf]
    %v75 = vld [vmem:[#allocation5 + $0x28] sm:$0xf]
    %v76 = vld [vmem:[#allocation5 + $0x2c] sm:$0xf]
    %v77 = vld [vmem:[#allocation5 + $0x30] sm:$0xf]
    %v78 = vld [vmem:[#allocation5 + $0x34] sm:$0xf]
    %v79 = vld [vmem:[#allocation5 + $0x38] sm:$0xf]
    %v80 = vld [vmem:[#allocation5 + $0x3c] sm:$0xf]
    %v81 = vld [vmem:[%s2] sm:$0x1]
    %v83 = vlaneseq
    %v84 = vshrl.u32 %v83, 7
    %v85 = vsub.s32 0, %v84
    %v86 = vrot.slane %v81, %v85
    %v90 = vunpack.c.l.b16 %v63
    %v91 = vunpack.c.l.b16 %v64
    %v92 = vpack.c.b16 %v91, %v90
    %v110 = vunpack.c.l.b16 %v65
    %v111 = vunpack.c.l.b16 %v66
    %v112 = vunpack.c.l.b16 %v67
    %v113 = vunpack.c.l.b16 %v68
    %v114 = vunpack.c.l.b16 %v69
    %v115 = vunpack.c.l.b16 %v70
    %v116 = vunpack.c.l.b16 %v71
    %v117 = vunpack.c.l.b16 %v72
    %v118 = vunpack.c.l.b16 %v73
    %v119 = vunpack.c.l.b16 %v74
    %v120 = vunpack.c.l.b16 %v75
    %v121 = vunpack.c.l.b16 %v76
    %v122 = vunpack.c.l.b16 %v77
    %v123 = vunpack.c.l.b16 %v78
    %v124 = vunpack.c.l.b16 %v79
    %v125 = vunpack.c.l.b16 %v80
    %v126 = vpack.c.b16 %v111, %v110
    %v127 = vpack.c.b16 %v113, %v112
    %v128 = vpack.c.b16 %v115, %v114
    %v129 = vpack.c.b16 %v117, %v116
    %v130 = vpack.c.b16 %v119, %v118
    %v131 = vpack.c.b16 %v121, %v120
    %v132 = vpack.c.b16 %v123, %v122
    %v133 = vpack.c.b16 %v125, %v124
    %142 = vmatprep.subr.bf16.mxu0 0
    %143 = vmatpush1.bf16.msra.mxu0 %v126
    %144 = vmatprep.subr.bf16.mxu0 0
    %145 = vmatpush1.bf16.msra.mxu0 %v127
    %146 = vmatprep.subr.bf16.mxu0 0
    %147 = vmatpush1.bf16.msra.mxu0 %v128
    %148 = vmatprep.subr.bf16.mxu0 0
    %149 = vmatpush1.bf16.msra.mxu0 %v129
    %150 = vmatprep.subr.bf16.mxu0 0
    %151 = vmatpush1.bf16.msra.mxu0 %v130
    %152 = vmatprep.subr.bf16.mxu0 0
    %153 = vmatpush1.bf16.msra.mxu0 %v131
    %154 = vmatprep.subr.bf16.mxu0 0
    %155 = vmatpush1.bf16.msra.mxu0 %v132
    %156 = vmatprep.subr.bf16.mxu0 0
    %157 = vmatpush1.bf16.msra.mxu0 %v133
    %158 = vmatprep.subr.bf16.mxu0 0
    %159 = vmatpush1.bf16.msra.mxu0 0
    %160 = vmatprep.subr.bf16.mxu0 0
    %161 = vmatpush1.bf16.msra.mxu0 0
    %162 = vmatprep.subr.bf16.mxu0 0
    %163 = vmatpush1.bf16.msra.mxu0 0
    %164 = vmatprep.subr.bf16.mxu0 0
    %165 = vmatpush1.bf16.msra.mxu0 0
    %166 = vmatprep.subr.bf16.mxu0 0
    %167 = vmatpush1.bf16.msra.mxu0 0
    %168 = vmatprep.subr.bf16.mxu0 0
    %169 = vmatpush1.bf16.msra.mxu0 0
    %170 = vmatprep.subr.bf16.mxu0 0
    %171 = vmatpush1.bf16.msra.mxu0 0
    %172 = vmatprep.subr.bf16.mxu0 0
    %173 = vmatpush1.bf16.msra.mxu0 0
    %174 = vmatprep.mubr.bf16.mxu0 0
    %175 = vmatmul.mubr.bf16.gmra.mrb[0].mxu0 %v92
    %v176 = vpop.f32.mrb[0].mxu0
    %v177 = vadd.f32 %v86, %v176
    %v178 = vpop.f32.mrb[0].mxu0
    %v179 = vpop.f32.mrb[0].mxu0
    %v180 = vadd.f32 %v86, %v179
    %v181 = vpop.f32.mrb[0].mxu0
    %182 = vdwg.mxu0
    %v183 = vmax.f32 %v177, 0.0
    %v184 = vmax.f32 %v180, 0.0
    %v185 = vpack.c.bf16 %v184, %v183
    %v186 = vld [vmem:[#allocation7] sm:$0xf]
    %v187 = vld [vmem:[#allocation7 + $0x4] sm:$0xf]
    %v188 = vld [vmem:[#allocation7 + $0x8] sm:$0xf]
    %v189 = vld [vmem:[#allocation7 + $0xc] sm:$0xf]
    %v190 = vld [vmem:[#allocation7 + $0x10] sm:$0xf]
    %v191 = vld [vmem:[#allocation7 + $0x14] sm:$0xf]
    %v192 = vld [vmem:[#allocation7 + $0x18] sm:$0xf]
    %v193 = vld [vmem:[#allocation7 + $0x1c] sm:$0xf]
    %v194 = vld [vmem:[#allocation7 + $0x20] sm:$0xf]
    %v195 = vld [vmem:[#allocation7 + $0x24] sm:$0xf]
    %v196 = vld [vmem:[#allocation7 + $0x28] sm:$0xf]
    %v197 = vld [vmem:[#allocation7 + $0x2c] sm:$0xf]
    %v198 = vld [vmem:[#allocation7 + $0x30] sm:$0xf]
    %v199 = vld [vmem:[#allocation7 + $0x34] sm:$0xf]
    %v200 = vld [vmem:[#allocation7 + $0x38] sm:$0xf]
    %v201 = vld [vmem:[#allocation7 + $0x3c] sm:$0xf]
    %v202 = vld [vmem:[%s4] sm:$0x1]
    %v204 = vlaneseq
    %v205 = vshrl.u32 %v204, 7
    %v206 = vsub.s32 0, %v205
    %v207 = vrot.slane %v202, %v206
    %v225 = vunpack.c.l.b16 %v186
    %v226 = vunpack.c.l.b16 %v187
    %v227 = vunpack.c.l.b16 %v188
    %v228 = vunpack.c.l.b16 %v189
    %v229 = vunpack.c.l.b16 %v190
    %v230 = vunpack.c.l.b16 %v191
    %v231 = vunpack.c.l.b16 %v192
    %v232 = vunpack.c.l.b16 %v193
    %v233 = vunpack.c.l.b16 %v194
    %v234 = vunpack.c.l.b16 %v195
    %v235 = vunpack.c.l.b16 %v196
    %v236 = vunpack.c.l.b16 %v197
    %v237 = vunpack.c.l.b16 %v198
    %v238 = vunpack.c.l.b16 %v199
    %v239 = vunpack.c.l.b16 %v200
    %v240 = vunpack.c.l.b16 %v201
    %v241 = vpack.c.b16 %v226, %v225
    %v242 = vpack.c.b16 %v228, %v227
    %v243 = vpack.c.b16 %v230, %v229
    %v244 = vpack.c.b16 %v232, %v231
    %v245 = vpack.c.b16 %v234, %v233
    %v246 = vpack.c.b16 %v236, %v235
    %v247 = vpack.c.b16 %v238, %v237
    %v248 = vpack.c.b16 %v240, %v239
    %257 = vmatprep.subr.bf16.mxu0 0
    %258 = vmatpush1.bf16.msra.mxu0 %v241
    %259 = vmatprep.subr.bf16.mxu0 0
    %260 = vmatpush1.bf16.msra.mxu0 %v242
    %261 = vmatprep.subr.bf16.mxu0 0
    %262 = vmatpush1.bf16.msra.mxu0 %v243
    %263 = vmatprep.subr.bf16.mxu0 0
    %264 = vmatpush1.bf16.msra.mxu0 %v244
    %265 = vmatprep.subr.bf16.mxu0 0
    %266 = vmatpush1.bf16.msra.mxu0 %v245
    %267 = vmatprep.subr.bf16.mxu0 0
    %268 = vmatpush1.bf16.msra.mxu0 %v246
    %269 = vmatprep.subr.bf16.mxu0 0
    %270 = vmatpush1.bf16.msra.mxu0 %v247
    %271 = vmatprep.subr.bf16.mxu0 0
    %272 = vmatpush1.bf16.msra.mxu0 %v248
    %273 = vmatprep.subr.bf16.mxu0 0
    %274 = vmatpush1.bf16.msra.mxu0 0
    %275 = vmatprep.subr.bf16.mxu0 0
    %276 = vmatpush1.bf16.msra.mxu0 0
    %277 = vmatprep.subr.bf16.mxu0 0
    %278 = vmatpush1.bf16.msra.mxu0 0
    %279 = vmatprep.subr.bf16.mxu0 0
    %280 = vmatpush1.bf16.msra.mxu0 0
    %281 = vmatprep.subr.bf16.mxu0 0
    %282 = vmatpush1.bf16.msra.mxu0 0
    %283 = vmatprep.subr.bf16.mxu0 0
    %284 = vmatpush1.bf16.msra.mxu0 0
    %285 = vmatprep.subr.bf16.mxu0 0
    %286 = vmatpush1.bf16.msra.mxu0 0
    %287 = vmatprep.subr.bf16.mxu0 0
    %288 = vmatpush1.bf16.msra.mxu0 0
    %289 = vmatprep.mubr.bf16.mxu0 0
    %290 = vmatmul.mubr.bf16.gmra.mrb[0].mxu0 %v185
    %v291 = vpop.f32.mrb[0].mxu0
    %v292 = vadd.f32 %v207, %v291
    %v293 = vpop.f32.mrb[0].mxu0
    %v294 = vpop.f32.mrb[0].mxu0
    %v295 = vadd.f32 %v207, %v294
    %v296 = vpop.f32.mrb[0].mxu0
    %297 = vdwg.mxu0
    %298 = vst [vmem:[#allocation8] sm:$0xff] %v292
    %299 = vst [vmem:[#allocation8 + $0x8] sm:$0xff] %v295
    // Predicated region
    $region34: #{tpu_custom_call.1} parent=1 // pred_check
      _
    $region35: #{tpu_custom_call.1} parent=1 // pred_check_branch
      %301 = sbr.rel (0) target = $region37
    $region36: #{tpu_custom_call.1} parent=1 // pred_region
      %s303 = ssub.s32 256, 256
      %304 = vsyncadd [#allocation4], %s303
      %s305 = sshll.u32 [#allocation8], 4
      %s306 = int_to_ptr.vmem [resolvable:$true] %s305
      %311 = dma.vmem_to_hbm [thread:$0]  %s306, 256, %s5, [#allocation4], 128, 128, 8
    $region37: #{tpu_custom_call.1} parent=1 // pred_fallthru
      _
    // Predicated region
    $region38: #{tpu_custom_call.1} parent=1 // pred_check
      _
    $region39: #{tpu_custom_call.1} parent=1 // pred_check_branch
      %313 = sbr.rel (0) target = $region41
    $region40: #{tpu_custom_call.1} parent=1 // pred_region
      %314 = dma.done [#allocation4], 256
    $region41: #{tpu_custom_call.1} parent=1 // pred_fallthru
      _
    %315 = vsyncpa [#allocation3], 1
    %316 = vsyncpa [#allocation6], 1
    %317 = vsyncpa [#allocation4], 1

</llo_original>
